<compile_context>
chip_gen: v5e
topology: v5e:2x2
jax: 0.10.0
libtpu: 0.0.40
codegen_flags: <defaults>
</compile_context>

<pallas_src>
import jax
import jax.numpy as jnp
from jax.experimental import pallas as pl
from jax.experimental.pallas import tpu as pltpu

NUM_CLASSES = 4
W3_PAD = 8           # last-layer output columns padded 4 -> 8 (zero weights)
NEG_BIG = -1.0e30    # baked into padded bias entries; exp() underflows to exactly 0
MAX_TB = 2048        # per-grid-step batch-tile cap (working set ~few MiB << VMEM)


def mlp_kernel(x_ref, w1_ref, b1_ref, w2_ref, b2_ref, w3_ref, b3_ref, out_ref):
    cdt = w1_ref.dtype                                   # MXU operand dtype (f32 or bf16)

    x = x_ref[...].astype(cdt)                           # (TB, 8)

    # Linear(8, 64) + ReLU   (weights pre-transposed to (in, out))
    h1 = jnp.dot(x, w1_ref[...], preferred_element_type=jnp.float32) + b1_ref[...]
    h1 = jnp.maximum(h1, 0.0)                            # (TB, 64) f32

    # Linear(64, 64) + ReLU
    h2 = jnp.dot(h1.astype(cdt), w2_ref[...], preferred_element_type=jnp.float32) + b2_ref[...]
    h2 = jnp.maximum(h2, 0.0)                            # (TB, 64) f32

    # Linear(64, 4) padded to 8 output columns; padded columns have zero weight and
    # NEG_BIG bias, so they never win the max and exp() underflows to exactly 0.
    logits = jnp.dot(h2.astype(cdt), w3_ref[...], preferred_element_type=jnp.float32) + b3_ref[...]

    # Numerically stable LogSoftmax over the feature axis.
    m = jnp.max(logits, axis=-1, keepdims=True)
    z = logits - m
    lse = jnp.log(jnp.sum(jnp.exp(z), axis=-1, keepdims=True))

    # Store only the real 4 classes (dense (TB, 4) block -> 16 B/row HBM writeback).
    out_ref[...] = (z - lse)[:, :NUM_CLASSES].astype(out_ref.dtype)


def prepare_params(params, *, use_bf16_matmul=False):
    """One-time layout plumbing (do NOT call per forward): transpose weights to (in, out),
    pad the last layer 4->8 columns, bake the padded-lane mask into its bias, reshape
    biases to (1, out)."""
    w1, b1, w2, b2, w3, b3 = params
    wdt = jnp.bfloat16 if use_bf16_matmul else jnp.float32
    w1t = jnp.asarray(w1, jnp.float32).T.astype(wdt)                     # (8, 64)
    w2t = jnp.asarray(w2, jnp.float32).T.astype(wdt)                     # (64, 64)
    w3p = jnp.zeros((64, W3_PAD), jnp.float32).at[:, :NUM_CLASSES].set(
        jnp.asarray(w3, jnp.float32).T).astype(wdt)                      # (64, 8)
    b1r = jnp.asarray(b1, jnp.float32).reshape(1, -1)                    # (1, 64)
    b2r = jnp.asarray(b2, jnp.float32).reshape(1, -1)                    # (1, 64)
    b3p = jnp.full((1, W3_PAD), NEG_BIG, jnp.float32).at[:, :NUM_CLASSES].set(
        jnp.asarray(b3, jnp.float32).reshape(1, -1))                     # (1, 8)
    return (w1t, b1r, w2t, b2r, w3p, b3p)


def _round_up(n, m):
    return ((n + m - 1) // m) * m


def _pick_batch_tile(B):
    if B <= 8:
        return 8
    # At least two (and an even number of) batch tiles so the "parallel" grid axis can be
    # sharded across v7x's two TensorCores; cap each tile at MAX_TB rows.
    n_steps = max(2, 2 * (-(-B // (2 * MAX_TB))))
    return min(MAX_TB, _round_up(-(-B // n_steps), 8))


@jax.jit
def neural_network_forward(x, prepared_params):
    """x: (B, 8) f32.  prepared_params: output of prepare_params()."""
    w1t, b1r, w2t, b2r, w3p, b3p = prepared_params
    B, F = x.shape

    TB = _pick_batch_tile(B)
    B_pad = _round_up(B, TB)
    if B_pad != B:
        x = jnp.pad(x, ((0, B_pad - B), (0, 0)))
    grid = (B_pad // TB,)

    moving = lambda shape: pl.BlockSpec(shape, lambda i: (i, 0))      # streamed per step
    resident = lambda arr: pl.BlockSpec(arr.shape, lambda i: (0, 0))  # stays in VMEM

    out = pl.pallas_call(
        mlp_kernel,
        out_shape=jax.ShapeDtypeStruct((B_pad, NUM_CLASSES), jnp.float32),
        grid=grid,
        in_specs=[
            moving((TB, F)),
            resident(w1t), resident(b1r),
            resident(w2t), resident(b2r),
            resident(w3p), resident(b3p),
        ],
        out_specs=moving((TB, NUM_CLASSES)),
        compiler_params=pltpu.CompilerParams(
            dimension_semantics=("parallel",)),
    )(x, w1t, b1r, w2t, b2r, w3p, b3p)

    return out if B_pad == B else out[:B]


def init_params(key):
    # Deterministic init mimicking nn.Linear defaults (uniform(-1/sqrt(fan_in), +)),
    # stored in PyTorch layout: W (out_features, in_features), b (out_features,).
    ks = jax.random.split(key, 6)

    def lin(kw, kb, fan_in, fan_out):
        bound = 1.0 / jnp.sqrt(fan_in)
        w = jax.random.uniform(kw, (fan_out, fan_in), jnp.float32, -bound, bound)
        b = jax.random.uniform(kb, (fan_out,), jnp.float32, -bound, bound)
        return w, b

    w1, b1 = lin(ks[0], ks[1], 8, 64)
    w2, b2 = lin(ks[2], ks[3], 64, 64)
    w3, b3 = lin(ks[4], ks[5], 64, 4)
    return (w1, b1, w2, b2, w3, b3)


if __name__ == "__main__":
    key = jax.random.PRNGKey(0)
    kx, kp = jax.random.split(key)
    params = init_params(kp)
    prepared = prepare_params(params)   # one-time layout plumbing, outside the hot path

    batch = 8
    x = jax.random.normal(kx, (batch, 8), jnp.float32)

    out = neural_network_forward(x, prepared)
    out = jax.block_until_ready(out)

    # Reference check in plain JAX (PyTorch semantics).
    w1, b1, w2, b2, w3, b3 = params
    h1 = jnp.maximum(x @ w1.T + b1, 0.0)
    h2 = jnp.maximum(h1 @ w2.T + b2, 0.0)
    ref = jax.nn.log_softmax(h2 @ w3.T + b3, axis=1)
    assert out.shape == (batch, NUM_CLASSES)
    assert jnp.allclose(out, ref, atol=1e-5), "mismatch vs reference"

    print("KERNEL_OK")
</pallas_src>

<mosaic_0001>
module attributes {stable_mosaic.version = 11 : i64} {
  func.func @mlp_kernel(%arg0: i32, %arg1: memref<8x8xf32, #tpu.memory_space<vmem>>, %arg2: memref<8x64xf32, #tpu.memory_space<vmem>>, %arg3: memref<1x64xf32, #tpu.memory_space<vmem>>, %arg4: memref<64x64xf32, #tpu.memory_space<vmem>>, %arg5: memref<1x64xf32, #tpu.memory_space<vmem>>, %arg6: memref<64x8xf32, #tpu.memory_space<vmem>>, %arg7: memref<1x8xf32, #tpu.memory_space<vmem>>, %arg8: memref<8x4xf32, #tpu.memory_space<vmem>>) attributes {dimension_semantics = [#tpu.dimension_semantics<parallel>], iteration_bounds = array<i64: 1>, scalar_prefetch = 0 : i64, scratch_operands = 0 : i64, tpu.core_type = #tpu.core_type<tc>, window_params = [{transform_indices = @transform_0, window_bounds = array<i64: 8, 8>}, {pipeline_mode = #tpu.pipeline_mode<synchronous>, transform_indices = @transform_1, window_bounds = array<i64: 8, 64>}, {pipeline_mode = #tpu.pipeline_mode<synchronous>, transform_indices = @transform_2, window_bounds = array<i64: 1, 64>}, {pipeline_mode = #tpu.pipeline_mode<synchronous>, transform_indices = @transform_3, window_bounds = array<i64: 64, 64>}, {pipeline_mode = #tpu.pipeline_mode<synchronous>, transform_indices = @transform_4, window_bounds = array<i64: 1, 64>}, {pipeline_mode = #tpu.pipeline_mode<synchronous>, transform_indices = @transform_5, window_bounds = array<i64: 64, 8>}, {pipeline_mode = #tpu.pipeline_mode<synchronous>, transform_indices = @transform_6, window_bounds = array<i64: 1, 8>}, {transform_indices = @transform_7, window_bounds = array<i64: 8, 4>}]} {
    %c0 = arith.constant 0 : index
    %c0_0 = arith.constant 0 : index
    %0 = vector.load %arg1[%c0, %c0_0] : memref<8x8xf32, #tpu.memory_space<vmem>>, vector<8x8xf32>
    %c0_1 = arith.constant 0 : index
    %c0_2 = arith.constant 0 : index
    %1 = vector.load %arg2[%c0_1, %c0_2] : memref<8x64xf32, #tpu.memory_space<vmem>>, vector<8x64xf32>
    %cst = arith.constant dense<0.000000e+00> : vector<8x64xf32>
    %2 = tpu.matmul %0, %1, %cst {dimension_numbers = #tpu.dot_dimension_numbers<[1], [0], [0], [1], [0, 0, 1, 1], [], []>} : vector<8x8xf32>, vector<8x64xf32>, vector<8x64xf32> -> vector<8x64xf32>
    %c0_3 = arith.constant 0 : index
    %c0_4 = arith.constant 0 : index
    %3 = vector.load %arg3[%c0_3, %c0_4] : memref<1x64xf32, #tpu.memory_space<vmem>>, vector<1x64xf32>
    %4 = vector.broadcast %3 : vector<1x64xf32> to vector<8x64xf32>
    %5 = arith.addf %2, %4 : vector<8x64xf32>
    %cst_5 = arith.constant 0.000000e+00 : f32
    %6 = vector.broadcast %cst_5 : f32 to vector<8x64xf32>
    %7 = arith.maximumf %5, %6 : vector<8x64xf32>
    %c0_6 = arith.constant 0 : index
    %c0_7 = arith.constant 0 : index
    %8 = vector.load %arg4[%c0_6, %c0_7] : memref<64x64xf32, #tpu.memory_space<vmem>>, vector<64x64xf32>
    %cst_8 = arith.constant dense<0.000000e+00> : vector<8x64xf32>
    %9 = tpu.matmul %7, %8, %cst_8 {dimension_numbers = #tpu.dot_dimension_numbers<[1], [0], [0], [1], [0, 0, 1, 1], [], []>} : vector<8x64xf32>, vector<64x64xf32>, vector<8x64xf32> -> vector<8x64xf32>
    %c0_9 = arith.constant 0 : index
    %c0_10 = arith.constant 0 : index
    %10 = vector.load %arg5[%c0_9, %c0_10] : memref<1x64xf32, #tpu.memory_space<vmem>>, vector<1x64xf32>
    %11 = vector.broadcast %10 : vector<1x64xf32> to vector<8x64xf32>
    %12 = arith.addf %9, %11 : vector<8x64xf32>
    %cst_11 = arith.constant 0.000000e+00 : f32
    %13 = vector.broadcast %cst_11 : f32 to vector<8x64xf32>
    %14 = arith.maximumf %12, %13 : vector<8x64xf32>
    %c0_12 = arith.constant 0 : index
    %c0_13 = arith.constant 0 : index
    %15 = vector.load %arg6[%c0_12, %c0_13] : memref<64x8xf32, #tpu.memory_space<vmem>>, vector<64x8xf32>
    %cst_14 = arith.constant dense<0.000000e+00> : vector<8x8xf32>
    %16 = tpu.matmul %14, %15, %cst_14 {dimension_numbers = #tpu.dot_dimension_numbers<[1], [0], [0], [1], [0, 0, 1, 1], [], []>} : vector<8x64xf32>, vector<64x8xf32>, vector<8x8xf32> -> vector<8x8xf32>
    %c0_15 = arith.constant 0 : index
    %c0_16 = arith.constant 0 : index
    %17 = vector.load %arg7[%c0_15, %c0_16] : memref<1x8xf32, #tpu.memory_space<vmem>>, vector<1x8xf32>
    %18 = vector.broadcast %17 : vector<1x8xf32> to vector<8x8xf32>
    %19 = arith.addf %16, %18 : vector<8x8xf32>
    %cst_17 = arith.constant dense<0xFF800000> : vector<8xf32>
    %20 = vector.multi_reduction <maximumf>, %19, %cst_17 [1] : vector<8x8xf32> to vector<8xf32>
    %21 = vector.shape_cast %20 : vector<8xf32> to vector<8x1xf32>
    %22 = vector.broadcast %21 : vector<8x1xf32> to vector<8x8xf32>
    %23 = arith.subf %19, %22 : vector<8x8xf32>
    %24 = math.exp %23 : vector<8x8xf32>
    %cst_18 = arith.constant dense<0.000000e+00> : vector<8xf32>
    %25 = vector.multi_reduction <add>, %24, %cst_18 [1] : vector<8x8xf32> to vector<8xf32>
    %26 = vector.shape_cast %25 : vector<8xf32> to vector<8x1xf32>
    %27 = math.log %26 : vector<8x1xf32>
    %28 = vector.broadcast %27 : vector<8x1xf32> to vector<8x8xf32>
    %29 = arith.subf %23, %28 : vector<8x8xf32>
    %30 = vector.extract_strided_slice %29 {offsets = [0, 0], sizes = [8, 4], strides = [1, 1]} : vector<8x8xf32> to vector<8x4xf32>
    %c0_19 = arith.constant 0 : index
    %c0_20 = arith.constant 0 : index
    %31 = vector.load %arg8[%c0_19, %c0_20] : memref<8x4xf32, #tpu.memory_space<vmem>>, vector<8x4xf32>
    tpu.vector_store %arg8[%c0_19, %c0_20], %30 {strides = array<i32>} : memref<8x4xf32, #tpu.memory_space<vmem>>, vector<8x4xf32>,
    return
  }
  func.func @transform_0(%arg0: i32) -> (i32, i32) {
    %c0_i32 = arith.constant 0 : i32
    %c0_i32_0 = arith.constant 0 : i32
    return %arg0, %c0_i32 : i32, i32
  }
  func.func @transform_1(%arg0: i32) -> (i32, i32) {
    %c0_i32 = arith.constant 0 : i32
    %c0_i32_0 = arith.constant 0 : i32
    %c0_i32_1 = arith.constant 0 : i32
    return %c0_i32, %c0_i32_0 : i32, i32
  }
  func.func @transform_2(%arg0: i32) -> (i32, i32) {
    %c0_i32 = arith.constant 0 : i32
    %c0_i32_0 = arith.constant 0 : i32
    %c0_i32_1 = arith.constant 0 : i32
    return %c0_i32, %c0_i32_0 : i32, i32
  }
  func.func @transform_3(%arg0: i32) -> (i32, i32) {
    %c0_i32 = arith.constant 0 : i32
    %c0_i32_0 = arith.constant 0 : i32
    %c0_i32_1 = arith.constant 0 : i32
    return %c0_i32, %c0_i32_0 : i32, i32
  }
  func.func @transform_4(%arg0: i32) -> (i32, i32) {
    %c0_i32 = arith.constant 0 : i32
    %c0_i32_0 = arith.constant 0 : i32
    %c0_i32_1 = arith.constant 0 : i32
    return %c0_i32, %c0_i32_0 : i32, i32
  }
  func.func @transform_5(%arg0: i32) -> (i32, i32) {
    %c0_i32 = arith.constant 0 : i32
    %c0_i32_0 = arith.constant 0 : i32
    %c0_i32_1 = arith.constant 0 : i32
    return %c0_i32, %c0_i32_0 : i32, i32
  }
  func.func @transform_6(%arg0: i32) -> (i32, i32) {
    %c0_i32 = arith.constant 0 : i32
    %c0_i32_0 = arith.constant 0 : i32
    %c0_i32_1 = arith.constant 0 : i32
    return %c0_i32, %c0_i32_0 : i32, i32
  }
  func.func @transform_7(%arg0: i32) -> (i32, i32) {
    %c0_i32 = arith.constant 0 : i32
    %c0_i32_0 = arith.constant 0 : i32
    return %arg0, %c0_i32 : i32, i32
  }
}

</mosaic_0001>

<llo_original>
// kernel: neural_network_forward.1
$region0: #{neural_network_forward.1}
  #allocation0 [shape = 'u32[]', space=smem, size = 0x4, offset = 0x4, fixed_abs, tag = 'smem constant byte address 0x4 - core index']
  #allocation1 [shape = 'u32[72,128]{1,0:T(1,128)}', space=vmem, size = 0x9000, scoped, tag = 'internal scratch']
  %s0 = inlined_call_operand.vmem [shape: f32[8,8], index: 0, kind: input, shape index: {}]
  %s1 = inlined_call_operand.hbm [shape: f32[8,64], index: 1, kind: input, shape index: {}]
  %s2 = inlined_call_operand.vmem [shape: f32[1,64], index: 2, kind: input, shape index: {}]
  %s3 = inlined_call_operand.vmem [shape: f32[64,64], index: 3, kind: input, shape index: {}]
  %s4 = inlined_call_operand.vmem [shape: f32[1,64], index: 4, kind: input, shape index: {}]
  %s5 = inlined_call_operand.vmem [shape: f32[64,8], index: 5, kind: input, shape index: {}]
  %s6 = inlined_call_operand.vmem [shape: f32[1,8], index: 6, kind: input, shape index: {}]
  %s7 = inlined_call_operand.vmem [shape: f32[8,4], index: 7, kind: output, shape index: {}]
  %s8 = sld [smem:[#allocation0]]
  $region42: #{neural_network_forward.1} parent=0
    _
  %s10 = ssub.s32 1, %s8
  %s11 = scalar_select 0, %s10, %s8
  $region1: #{neural_network_forward.1} parent=0
    #allocation2 [shape = 'u8[4096]{0}', space=vmem, size = 0x1000, scoped, tag = 'input window, operand 1, single buffered']
    #allocation3 [shape = 's32[1]{0}', space=sflag, size = 0x4, scoped, tag = 'scoped memory for neural_network_forward.1']
    %12 = vsyncpa [#allocation3], 0
    // Predicated region
    $region2: #{neural_network_forward.1} parent=1 // pred_check
      _
    $region3: #{neural_network_forward.1} parent=1 // pred_check_branch
      %14 = sbr.rel (0) target = $region5
    $region4: #{neural_network_forward.1} parent=1 // pred_region
      _
    $region5: #{neural_network_forward.1} parent=1 // pred_fallthru
      _
    // Predicated region
    $region6: #{neural_network_forward.1} parent=1 // pred_check
      _
    $region7: #{neural_network_forward.1} parent=1 // pred_check_branch
      %16 = sbr.rel (0) target = $region9
    $region8: #{neural_network_forward.1} parent=1 // pred_region
      %18 = vsyncadd [#allocation3], 0
      %s20 = sshll.u32 %s1, 4
      %s21 = int_to_ptr.hbm [resolvable:$true] %s20
      %s22 = sshll.u32 [#allocation2], 4
      %s23 = int_to_ptr.vmem [resolvable:$true] %s22
      %25 = dma.hbm_to_vmem [thread:$0]  %s21, 128, %s23, [#allocation3]
    $region9: #{neural_network_forward.1} parent=1 // pred_fallthru
      _
    // Predicated region
    $region10: #{neural_network_forward.1} parent=1 // pred_check
      _
    $region11: #{neural_network_forward.1} parent=1 // pred_check_branch
      %27 = sbr.rel (0) target = $region13
    $region12: #{neural_network_forward.1} parent=1 // pred_region
      _
    $region13: #{neural_network_forward.1} parent=1 // pred_fallthru
      _
    // Predicated region
    $region14: #{neural_network_forward.1} parent=1 // pred_check
      _
    $region15: #{neural_network_forward.1} parent=1 // pred_check_branch
      %29 = sbr.rel (0) target = $region17
    $region16: #{neural_network_forward.1} parent=1 // pred_region
      _
    $region17: #{neural_network_forward.1} parent=1 // pred_fallthru
      _
    // Predicated region
    $region18: #{neural_network_forward.1} parent=1 // pred_check
      _
    $region19: #{neural_network_forward.1} parent=1 // pred_check_branch
      %31 = sbr.rel (0) target = $region21
    $region20: #{neural_network_forward.1} parent=1 // pred_region
      _
    $region21: #{neural_network_forward.1} parent=1 // pred_fallthru
      _
    // Predicated region
    $region22: #{neural_network_forward.1} parent=1 // pred_check
      _
    $region23: #{neural_network_forward.1} parent=1 // pred_check_branch
      %33 = sbr.rel (0) target = $region25
    $region24: #{neural_network_forward.1} parent=1 // pred_region
      _
    $region25: #{neural_network_forward.1} parent=1 // pred_fallthru
      _
    // Predicated region
    $region26: #{neural_network_forward.1} parent=1 // pred_check
      _
    $region27: #{neural_network_forward.1} parent=1 // pred_check_branch
      %35 = sbr.rel (0) target = $region29
    $region28: #{neural_network_forward.1} parent=1 // pred_region
      _
    $region29: #{neural_network_forward.1} parent=1 // pred_fallthru
      _
    // Predicated region
    $region30: #{neural_network_forward.1} parent=1 // pred_check
      _
    $region31: #{neural_network_forward.1} parent=1 // pred_check_branch
      %37 = sbr.rel (0) target = $region33
    $region32: #{neural_network_forward.1} parent=1 // pred_region
      %39 = dma.done [#allocation3], 128
    $region33: #{neural_network_forward.1} parent=1 // pred_fallthru
      _
    %v40 = vld [vmem:[%s0] sm:$0xff]
    %v41 = vld [vmem:[#allocation2] sm:$0xff]
    %v42 = vld [vmem:[%s2] sm:$0x1]
    %v44 = vperm.slane %v42, 0
    %vm46 = vcmask 64512
    %v48 = vsel %vm46, %v40, 0
    %50 = vmatpush.msra.mxu0 0.0
    %51 = vmatpush.msra.mxu0 0.0
    %52 = vmatpush.msra.mxu0 0.0
    %53 = vmatpush.msra.mxu0 0.0
    %54 = vmatpush.msra.mxu0 0.0
    %55 = vmatpush.msra.mxu0 0.0
    %56 = vmatpush.msra.mxu0 0.0
    %57 = vmatpush.msra.mxu0 0.0
    %58 = vmatpush.msra.mxu0 0.0
    %59 = vmatpush.msra.mxu0 0.0
    %60 = vmatpush.msra.mxu0 0.0
    %61 = vmatpush.msra.mxu0 0.0
    %62 = vmatpush.msra.mxu0 0.0
    %63 = vmatpush.msra.mxu0 0.0
    %64 = vmatpush.msra.mxu0 0.0
    %65 = vmatpush.msra.mxu0 %v41
    %66 = vmatmul.f32.gmra.mxu0 %v48
    %v67 = vpop.f32.mrf.mxu0
    %v68 = vadd.f32 %v44, %v67
    %69 = vdwg.mxu0
    %v70 = vmax.f32 %v68, 0.0
    %v71 = vld [vmem:[%s3] sm:$0xff]
    %v72 = vld [vmem:[%s3 + $0x8] sm:$0xff]
    %v73 = vld [vmem:[%s3 + $0x10] sm:$0xff]
    %v74 = vld [vmem:[%s3 + $0x18] sm:$0xff]
    %v75 = vld [vmem:[%s3 + $0x20] sm:$0xff]
    %v76 = vld [vmem:[%s3 + $0x28] sm:$0xff]
    %v77 = vld [vmem:[%s3 + $0x30] sm:$0xff]
    %v78 = vld [vmem:[%s3 + $0x38] sm:$0xff]
    %v79 = vld [vmem:[%s4] sm:$0x1]
    %v81 = vperm.slane %v79, 0
    %vm83 = vcmask 523264
    %v85 = vsel %vm83, %v70, 0
    %87 = vmatpush.msra.mxu0 0.0
    %88 = vmatpush.msra.mxu0 0.0
    %89 = vmatpush.msra.mxu0 0.0
    %90 = vmatpush.msra.mxu0 0.0
    %91 = vmatpush.msra.mxu0 0.0
    %92 = vmatpush.msra.mxu0 0.0
    %93 = vmatpush.msra.mxu0 0.0
    %94 = vmatpush.msra.mxu0 0.0
    %95 = vmatpush.msra.mxu0 %v78
    %96 = vmatpush.msra.mxu0 %v77
    %97 = vmatpush.msra.mxu0 %v76
    %98 = vmatpush.msra.mxu0 %v75
    %99 = vmatpush.msra.mxu0 %v74
    %100 = vmatpush.msra.mxu0 %v73
    %101 = vmatpush.msra.mxu0 %v72
    %102 = vmatpush.msra.mxu0 %v71
    %103 = vmatmul.f32.gmra.mxu0 %v85
    %v104 = vpop.f32.mrf.mxu0
    %v105 = vadd.f32 %v81, %v104
    %106 = vdwg.mxu0
    %v107 = vmax.f32 %v105, 0.0
    %v108 = vld [vmem:[%s5] sm:$0xff]
    %v109 = vld [vmem:[%s5 + $0x8] sm:$0xff]
    %v110 = vld [vmem:[%s5 + $0x10] sm:$0xff]
    %v111 = vld [vmem:[%s5 + $0x18] sm:$0xff]
    %v112 = vld [vmem:[%s5 + $0x20] sm:$0xff]
    %v113 = vld [vmem:[%s5 + $0x28] sm:$0xff]
    %v114 = vld [vmem:[%s5 + $0x30] sm:$0xff]
    %v115 = vld [vmem:[%s5 + $0x38] sm:$0xff]
    %v116 = vld [vmem:[%s6] sm:$0x1]
    %v118 = vperm.slane %v116, 0
    %v121 = vsel %vm83, %v107, 0
    %123 = vmatpush.msra.mxu0 0.0
    %124 = vmatpush.msra.mxu0 0.0
    %125 = vmatpush.msra.mxu0 0.0
    %126 = vmatpush.msra.mxu0 0.0
    %127 = vmatpush.msra.mxu0 0.0
    %128 = vmatpush.msra.mxu0 0.0
    %129 = vmatpush.msra.mxu0 0.0
    %130 = vmatpush.msra.mxu0 0.0
    %131 = vmatpush.msra.mxu0 %v115
    %132 = vmatpush.msra.mxu0 %v114
    %133 = vmatpush.msra.mxu0 %v113
    %134 = vmatpush.msra.mxu0 %v112
    %135 = vmatpush.msra.mxu0 %v111
    %136 = vmatpush.msra.mxu0 %v110
    %137 = vmatpush.msra.mxu0 %v109
    %138 = vmatpush.msra.mxu0 %v108
    %139 = vmatmul.f32.gmra.mxu0 %v121
    %v140 = vpop.f32.mrf.mxu0
    %v141 = vadd.f32 %v118, %v140
    %142 = vdwg.mxu0
    %v143 = vsel %vm46, %v141, -inf
    %144 = vmax.xlane.f32.xlu0 %v143
    %v145 = vpop.xlane.xlu0 %144
    %v146 = vsub.f32 %v141, %v145
    %v147 = vmul.f32 %v146, 1.442695
    %v148 = vpow.pop %v147
    %v149 = vsel %vm46, %v148, 0.0
    %150 = vadd.xlane.f32.xlu0 %v149
    %v151 = vpop.xlane.xlu0 %150
    %v152 = vlog2.pop %v151
    %v153 = vmul.f32 %v152, 0.6931472
    %v154 = vsub.f32 %v146, %v153
    %vm155 = vcmask 31744
    %156 = vst.msk [vmem:[%s7] sm:$0xff] %vm155, %v154
    // Predicated region
    $region34: #{neural_network_forward.1} parent=1 // pred_check
      _
    $region35: #{neural_network_forward.1} parent=1 // pred_check_branch
      %158 = sbr.rel (0) target = $region37
    $region36: #{neural_network_forward.1} parent=1 // pred_region
      _
    $region37: #{neural_network_forward.1} parent=1 // pred_fallthru
      _
    // Predicated region
    $region38: #{neural_network_forward.1} parent=1 // pred_check
      _
    $region39: #{neural_network_forward.1} parent=1 // pred_check_branch
      %160 = sbr.rel (0) target = $region41
    $region40: #{neural_network_forward.1} parent=1 // pred_region
      _
    $region41: #{neural_network_forward.1} parent=1 // pred_fallthru
      _
    %161 = vsyncpa [#allocation3], 1

</llo_original>
